<compile_context>
chip_gen: v5e
topology: v5e:2x2
jax: 0.10.0
libtpu: 0.0.40
codegen_flags: <defaults>
</compile_context>

<pallas_src>
import functools
import math

import jax
import jax.numpy as jnp
from jax import lax
from jax.experimental import pallas as pl
from jax.experimental.pallas import tpu as pltpu


def _round_up(x, m):
    return ((x + m - 1) // m) * m


def lima_kernel(theta_ref, w_ref, gamma_ref, beta_ref, out_ref, *, a, b, ln_eps):
    # theta_ref : (TN, D) f32   -- input tile
    # w_ref     : (D, D)  f32   -- Theta weight matrix (resident, same every step)
    # gamma_ref : (1, D)  f32   -- LayerNorm weight
    # beta_ref  : (1, D)  f32   -- LayerNorm bias
    # out_ref   : (TN, D) f32
    t = theta_ref[...]
    ct = jnp.cos(t)                       # EUP
    c2t = 2.0 * ct * ct - 1.0             # cos(2t) via double angle (VPU only)
    o = (a - b) + a * ct + b * c2t        # (TN, D)

    # o @ Theta on the MXU, f32 accumulation.
    y = jnp.dot(o, w_ref[...], preferred_element_type=jnp.float32)   # (TN, D)

    # LayerNorm over the last dim.
    mean = jnp.mean(y, axis=-1, keepdims=True)
    yc = y - mean
    var = jnp.mean(yc * yc, axis=-1, keepdims=True)
    inv = lax.rsqrt(var + ln_eps)
    out_ref[...] = (yc * inv) * gamma_ref[...] + beta_ref[...]


def lima_forward(theta, Theta, gamma, beta, *, a, b, ln_eps=1e-5, row_tile=512):
    """JAX/Pallas equivalent of Lima.forward. Returns f32 with theta's shape."""
    orig_shape = theta.shape
    D = orig_shape[-1]
    N = math.prod(orig_shape[:-1]) if len(orig_shape) > 1 else 1
    x = theta.reshape(N, D).astype(jnp.float32)

    # Row tile: big (HBM-friendly) but never larger than the (8-aligned) row
    # count; pad the remainder instead of asserting divisibility.
    tile = min(row_tile, _round_up(N, 8))
    Np = _round_up(N, tile)
    if Np != N:
        x = jnp.pad(x, ((0, Np - N), (0, 0)))

    grid = (Np // tile,)
    row_spec = pl.BlockSpec((tile, D), lambda i: (i, 0))

    kernel = functools.partial(
        lima_kernel, a=float(a), b=float(b), ln_eps=float(ln_eps))

    out = pl.pallas_call(
        kernel,
        out_shape=jax.ShapeDtypeStruct((Np, D), jnp.float32),
        grid=grid,
        in_specs=[
            row_spec,                                  # theta tile
            pl.BlockSpec((D, D), lambda i: (0, 0)),    # Theta weight (full)
            pl.BlockSpec((1, D), lambda i: (0, 0)),    # LN gamma
            pl.BlockSpec((1, D), lambda i: (0, 0)),    # LN beta
        ],
        out_specs=row_spec,
        compiler_params=pltpu.CompilerParams(
            dimension_semantics=("parallel",)),
    )(x,
      Theta.astype(jnp.float32),
      gamma.reshape(1, D).astype(jnp.float32),
      beta.reshape(1, D).astype(jnp.float32))

    return out[:N].reshape(orig_shape)


def reference_forward(theta, Theta, gamma, beta, *, a, b, ln_eps=1e-5):
    o = (a - b) + a * jnp.cos(theta) + b * jnp.cos(2.0 * theta)
    y = o @ Theta
    mean = jnp.mean(y, axis=-1, keepdims=True)
    var = jnp.mean((y - mean) ** 2, axis=-1, keepdims=True)
    return (y - mean) * lax.rsqrt(var + ln_eps) * gamma + beta


if __name__ == "__main__":
    dim = 64
    B, S = 2, 8
    eps = 1e-4

    # Module constants (requires_grad=False parameters in the PyTorch module).
    a = math.pi / 4.0 - eps
    b = a / 4.0
    ln_eps = 1e-5                      # nn.LayerNorm default

    key = jax.random.PRNGKey(0)
    k_w, k_t = jax.random.split(key, 2)

    # Learnable parameters (deterministic synthetic init matching the module).
    Theta = jax.random.uniform(k_w, (dim, dim), jnp.float32) * (2.0 * math.pi) - math.pi
    gamma = jnp.ones((dim,), jnp.float32)     # LayerNorm weight
    beta = jnp.zeros((dim,), jnp.float32)     # LayerNorm bias

    # Input.
    theta = jax.random.normal(k_t, (B, S, dim), jnp.float32)

    out = lima_forward(theta, Theta, gamma, beta, a=a, b=b, ln_eps=ln_eps)
    out = jax.block_until_ready(out)

    ref = reference_forward(theta, Theta, gamma, beta, a=a, b=b, ln_eps=ln_eps)
    assert out.shape == (B, S, dim) and out.dtype == jnp.float32
    assert jnp.allclose(out, ref, atol=1e-4, rtol=1e-4)

    print("KERNEL_OK")
</pallas_src>

<mosaic_0001>
module attributes {stable_mosaic.version = 11 : i64} {
  func.func @lima_kernel(%arg0: i32, %arg1: memref<16x64xf32, #tpu.memory_space<vmem>>, %arg2: memref<64x64xf32, #tpu.memory_space<vmem>>, %arg3: memref<1x64xf32, #tpu.memory_space<vmem>>, %arg4: memref<1x64xf32, #tpu.memory_space<vmem>>, %arg5: memref<16x64xf32, #tpu.memory_space<vmem>>) attributes {dimension_semantics = [#tpu.dimension_semantics<parallel>], iteration_bounds = array<i64: 1>, scalar_prefetch = 0 : i64, scratch_operands = 0 : i64, tpu.core_type = #tpu.core_type<tc>, window_params = [{transform_indices = @transform_0, window_bounds = array<i64: 16, 64>}, {pipeline_mode = #tpu.pipeline_mode<synchronous>, transform_indices = @transform_1, window_bounds = array<i64: 64, 64>}, {pipeline_mode = #tpu.pipeline_mode<synchronous>, transform_indices = @transform_2, window_bounds = array<i64: 1, 64>}, {pipeline_mode = #tpu.pipeline_mode<synchronous>, transform_indices = @transform_3, window_bounds = array<i64: 1, 64>}, {transform_indices = @transform_4, window_bounds = array<i64: 16, 64>}]} {
    %c0 = arith.constant 0 : index
    %c0_0 = arith.constant 0 : index
    %0 = vector.load %arg1[%c0, %c0_0] : memref<16x64xf32, #tpu.memory_space<vmem>>, vector<16x64xf32>
    %1 = math.cos %0 : vector<16x64xf32>
    %cst = arith.constant 2.000000e+00 : f32
    %2 = vector.broadcast %cst : f32 to vector<16x64xf32>
    %3 = arith.mulf %2, %1 : vector<16x64xf32>
    %4 = arith.mulf %3, %1 : vector<16x64xf32>
    %cst_1 = arith.constant 1.000000e+00 : f32
    %5 = vector.broadcast %cst_1 : f32 to vector<16x64xf32>
    %6 = arith.subf %4, %5 : vector<16x64xf32>
    %cst_2 = arith.constant 0.785298168 : f32
    %7 = vector.broadcast %cst_2 : f32 to vector<16x64xf32>
    %8 = arith.mulf %7, %1 : vector<16x64xf32>
    %cst_3 = arith.constant 0.588973641 : f32
    %9 = vector.broadcast %cst_3 : f32 to vector<16x64xf32>
    %10 = arith.addf %9, %8 : vector<16x64xf32>
    %cst_4 = arith.constant 0.196324542 : f32
    %11 = vector.broadcast %cst_4 : f32 to vector<16x64xf32>
    %12 = arith.mulf %11, %6 : vector<16x64xf32>
    %13 = arith.addf %10, %12 : vector<16x64xf32>
    %c0_5 = arith.constant 0 : index
    %c0_6 = arith.constant 0 : index
    %14 = vector.load %arg2[%c0_5, %c0_6] : memref<64x64xf32, #tpu.memory_space<vmem>>, vector<64x64xf32>
    %cst_7 = arith.constant dense<0.000000e+00> : vector<16x64xf32>
    %15 = tpu.matmul %13, %14, %cst_7 {dimension_numbers = #tpu.dot_dimension_numbers<[1], [0], [0], [1], [0, 0, 1, 1], [], []>} : vector<16x64xf32>, vector<64x64xf32>, vector<16x64xf32> -> vector<16x64xf32>
    %cst_8 = arith.constant dense<0.000000e+00> : vector<16xf32>
    %16 = vector.multi_reduction <add>, %15, %cst_8 [1] : vector<16x64xf32> to vector<16xf32>
    %17 = vector.shape_cast %16 : vector<16xf32> to vector<16x1xf32>
    %cst_9 = arith.constant 6.400000e+01 : f32
    %18 = vector.broadcast %cst_9 : f32 to vector<16x1xf32>
    %19 = arith.divf %17, %18 : vector<16x1xf32>
    %20 = vector.broadcast %19 : vector<16x1xf32> to vector<16x64xf32>
    %21 = arith.subf %15, %20 : vector<16x64xf32>
    %22 = arith.mulf %21, %21 : vector<16x64xf32>
    %cst_10 = arith.constant dense<0.000000e+00> : vector<16xf32>
    %23 = vector.multi_reduction <add>, %22, %cst_10 [1] : vector<16x64xf32> to vector<16xf32>
    %24 = vector.shape_cast %23 : vector<16xf32> to vector<16x1xf32>
    %cst_11 = arith.constant 6.400000e+01 : f32
    %25 = vector.broadcast %cst_11 : f32 to vector<16x1xf32>
    %26 = arith.divf %24, %25 : vector<16x1xf32>
    %cst_12 = arith.constant 9.99999974E-6 : f32
    %27 = vector.broadcast %cst_12 : f32 to vector<16x1xf32>
    %28 = arith.addf %26, %27 : vector<16x1xf32>
    %29 = math.rsqrt %28 : vector<16x1xf32>
    %30 = vector.broadcast %29 : vector<16x1xf32> to vector<16x64xf32>
    %31 = arith.mulf %21, %30 : vector<16x64xf32>
    %c0_13 = arith.constant 0 : index
    %c0_14 = arith.constant 0 : index
    %32 = vector.load %arg3[%c0_13, %c0_14] : memref<1x64xf32, #tpu.memory_space<vmem>>, vector<1x64xf32>
    %33 = vector.broadcast %32 : vector<1x64xf32> to vector<16x64xf32>
    %34 = arith.mulf %31, %33 : vector<16x64xf32>
    %c0_15 = arith.constant 0 : index
    %c0_16 = arith.constant 0 : index
    %35 = vector.load %arg4[%c0_15, %c0_16] : memref<1x64xf32, #tpu.memory_space<vmem>>, vector<1x64xf32>
    %36 = vector.broadcast %35 : vector<1x64xf32> to vector<16x64xf32>
    %37 = arith.addf %34, %36 : vector<16x64xf32>
    %c0_17 = arith.constant 0 : index
    %c0_18 = arith.constant 0 : index
    %38 = vector.load %arg5[%c0_17, %c0_18] : memref<16x64xf32, #tpu.memory_space<vmem>>, vector<16x64xf32>
    tpu.vector_store %arg5[%c0_17, %c0_18], %37 {strides = array<i32>} : memref<16x64xf32, #tpu.memory_space<vmem>>, vector<16x64xf32>,
    return
  }
  func.func @transform_0(%arg0: i32) -> (i32, i32) {
    %c0_i32 = arith.constant 0 : i32
    %c0_i32_0 = arith.constant 0 : i32
    return %arg0, %c0_i32 : i32, i32
  }
  func.func @transform_1(%arg0: i32) -> (i32, i32) {
    %c0_i32 = arith.constant 0 : i32
    %c0_i32_0 = arith.constant 0 : i32
    %c0_i32_1 = arith.constant 0 : i32
    return %c0_i32, %c0_i32_0 : i32, i32
  }
  func.func @transform_2(%arg0: i32) -> (i32, i32) {
    %c0_i32 = arith.constant 0 : i32
    %c0_i32_0 = arith.constant 0 : i32
    %c0_i32_1 = arith.constant 0 : i32
    return %c0_i32, %c0_i32_0 : i32, i32
  }
  func.func @transform_3(%arg0: i32) -> (i32, i32) {
    %c0_i32 = arith.constant 0 : i32
    %c0_i32_0 = arith.constant 0 : i32
    %c0_i32_1 = arith.constant 0 : i32
    return %c0_i32, %c0_i32_0 : i32, i32
  }
  func.func @transform_4(%arg0: i32) -> (i32, i32) {
    %c0_i32 = arith.constant 0 : i32
    %c0_i32_0 = arith.constant 0 : i32
    return %arg0, %c0_i32 : i32, i32
  }
}

</mosaic_0001>

<llo_original>
// kernel: tpu_custom_call.1
$region0: #{tpu_custom_call.1}
  #allocation0 [shape = 'u32[]', space=smem, size = 0x4, offset = 0x4, fixed_abs, tag = 'smem constant byte address 0x4 - core index']
  #allocation1 [shape = 'u32[72,128]{1,0:T(1,128)}', space=vmem, size = 0x9000, scoped, tag = 'internal scratch']
  %s0 = inlined_call_operand.hbm [shape: f32[16,64], index: 0, kind: input, shape index: {}]
  %s1 = inlined_call_operand.hbm [shape: f32[64,64], index: 1, kind: input, shape index: {}]
  %s2 = inlined_call_operand.vmem [shape: f32[1,64], index: 2, kind: input, shape index: {}]
  %s3 = inlined_call_operand.vmem [shape: f32[1,64], index: 3, kind: input, shape index: {}]
  %s4 = inlined_call_operand.hbm [shape: f32[16,64], index: 4, kind: output, shape index: {}]
  %s5 = sld [smem:[#allocation0]]
  $region34: #{tpu_custom_call.1} parent=0
    _
  %s7 = ssub.s32 1, %s5
  %s8 = scalar_select 0, %s7, %s5
  $region1: #{tpu_custom_call.1} parent=0
    #allocation2 [shape = 'u8[8192]{0}', space=vmem, size = 0x2000, scoped, tag = 'input window, operand 0, single buffered']
    #allocation3 [shape = 's32[1]{0}', space=sflag, size = 0x4, scoped, tag = 'scoped memory for tpu_custom_call.1']
    #allocation4 [shape = 's32[1]{0}', space=sflag, size = 0x4, scoped, tag = 'scoped memory for tpu_custom_call.1']
    #allocation5 [shape = 'u8[32768]{0}', space=vmem, size = 0x8000, scoped, tag = 'input window, operand 1, single buffered']
    #allocation6 [shape = 's32[1]{0}', space=sflag, size = 0x4, scoped, tag = 'scoped memory for tpu_custom_call.1']
    #allocation7 [shape = 'u8[8192]{0}', space=vmem, size = 0x2000, scoped, tag = 'output window, operand 0, single buffered']
    %9 = vsyncpa [#allocation3], 0
    %10 = vsyncpa [#allocation6], 0
    %11 = vsyncpa [#allocation4], 0
    // Predicated region
    $region2: #{tpu_custom_call.1} parent=1 // pred_check
      _
    $region3: #{tpu_custom_call.1} parent=1 // pred_check_branch
      %13 = sbr.rel (0) target = $region5
    $region4: #{tpu_custom_call.1} parent=1 // pred_region
      %15 = vsyncadd [#allocation3], 0
      %s16 = sshll.u32 %s0, 4
      %s17 = int_to_ptr.hbm [resolvable:$true] %s16
      %s18 = sshll.u32 [#allocation2], 4
      %s19 = int_to_ptr.vmem [resolvable:$true] %s18
      %24 = dma.hbm_to_vmem [thread:$0]  %s17, 256, %s19, [#allocation3], 128, 128, 8
    $region5: #{tpu_custom_call.1} parent=1 // pred_fallthru
      _
    // Predicated region
    $region6: #{tpu_custom_call.1} parent=1 // pred_check
      _
    $region7: #{tpu_custom_call.1} parent=1 // pred_check_branch
      %26 = sbr.rel (0) target = $region9
    $region8: #{tpu_custom_call.1} parent=1 // pred_region
      %28 = vsyncadd [#allocation6], 0
      %s29 = sshll.u32 %s1, 4
      %s30 = int_to_ptr.hbm [resolvable:$true] %s29
      %s31 = sshll.u32 [#allocation5], 4
      %s32 = int_to_ptr.vmem [resolvable:$true] %s31
      %37 = dma.hbm_to_vmem [thread:$0]  %s30, 1024, %s32, [#allocation6], 128, 128, 8
    $region9: #{tpu_custom_call.1} parent=1 // pred_fallthru
      _
    // Predicated region
    $region10: #{tpu_custom_call.1} parent=1 // pred_check
      _
    $region11: #{tpu_custom_call.1} parent=1 // pred_check_branch
      %39 = sbr.rel (0) target = $region13
    $region12: #{tpu_custom_call.1} parent=1 // pred_region
      _
    $region13: #{tpu_custom_call.1} parent=1 // pred_fallthru
      _
    // Predicated region
    $region14: #{tpu_custom_call.1} parent=1 // pred_check
      _
    $region15: #{tpu_custom_call.1} parent=1 // pred_check_branch
      %41 = sbr.rel (0) target = $region17
    $region16: #{tpu_custom_call.1} parent=1 // pred_region
      _
    $region17: #{tpu_custom_call.1} parent=1 // pred_fallthru
      _
    // Predicated region
    $region18: #{tpu_custom_call.1} parent=1 // pred_check
      _
    $region19: #{tpu_custom_call.1} parent=1 // pred_check_branch
      %43 = sbr.rel (0) target = $region21
    $region20: #{tpu_custom_call.1} parent=1 // pred_region
      %45 = dma.done [#allocation3], 256
    $region21: #{tpu_custom_call.1} parent=1 // pred_fallthru
      _
    // Predicated region
    $region22: #{tpu_custom_call.1} parent=1 // pred_check
      _
    $region23: #{tpu_custom_call.1} parent=1 // pred_check_branch
      %47 = sbr.rel (0) target = $region25
    $region24: #{tpu_custom_call.1} parent=1 // pred_region
      %49 = dma.done [#allocation6], 1024
    $region25: #{tpu_custom_call.1} parent=1 // pred_fallthru
      _
    %v50 = vld [vmem:[#allocation2] sm:$0xff]
    %v51 = vld [vmem:[#allocation2 + $0x8] sm:$0xff]
    %v52 = vand.u32 2147483647, %v50
    %vm53 = vcmp.le.f32.partialorder %v52, 0.7853982
    %vm54 = vcmp.lt.s32.totalorder %v50, 0
    %v55 = vand.u32 %v50, 2139095040
    %v56 = vshrl.u32 %v55, 23
    %v57 = vsub.s32 %v56, 127
    %v58 = vand.u32 2147483647, %v50
    %v59 = vand.u32 %v58, 8388607
    %v60 = vor.u32 %v59, 8388608
    %v61 = vsub.s32 0, %v60
    %v62 = vadd.s32 %v57, 1
    %vm63 = vcmp.gt.s32.totalorder %v62, 0
    %v64 = vsel %vm63, %v62, 0
    %v65 = vshrl.u32 %v64, 5
    %v66 = vand.u32 %v64, 31
    %v67 = vsub.s32 32, %v66
    %v68 = vshrl.u32 683565275, %v67
    %v69 = vshll.u32 683565275, %v66
    %v70 = vshrl.u32 2475754826, %v67
    %v71 = vor.u32 %v69, %v70
    %v72 = vshll.u32 2475754826, %v66
    %v73 = vshrl.u32 2131351028, %v67
    %v74 = vor.u32 %v72, %v73
    %v75 = vshll.u32 2131351028, %v66
    %v76 = vshrl.u32 2102212464, %v67
    %v77 = vor.u32 %v75, %v76
    %v78 = vshll.u32 2102212464, %v66
    %v79 = vshrl.u32 920167782, %v67
    %v80 = vor.u32 %v78, %v79
    %v81 = vshll.u32 920167782, %v66
    %v82 = vshrl.u32 1326507024, %v67
    %v83 = vor.u32 %v81, %v82
    %vm84 = vcmp.lt.s32.totalorder %v65, 1
    %vm85 = vcmp.lt.s32.totalorder %v65, 2
    %vm86 = vcmp.lt.s32.totalorder %v65, 3
    %vm87 = vcmp.lt.s32.totalorder %v65, 4
    %v88 = vsel %vm84, %v68, %v71
    %v89 = vsel %vm87, %v77, 2102212464
    %v90 = vsel %vm86, %v74, %v89
    %v91 = vsel %vm85, %v88, %v90
    %v92 = vsel %vm84, %v71, %v74
    %v93 = vsel %vm87, %v80, 920167782
    %v94 = vsel %vm86, %v77, %v93
    %v95 = vsel %vm85, %v92, %v94
    %v96 = vsel %vm84, %v74, %v77
    %v97 = vsel %vm87, %v83, 1326507024
    %v98 = vsel %vm86, %v80, %v97
    %v99 = vsel %vm85, %v96, %v98
    %v100 = vshll.u32 %v60, 8
    %v101 = vand.u32 %v100, 65535
    %v102 = vshrl.u32 %v100, 16
    %v103 = vand.u32 %v99, 65535
    %v104 = vshrl.u32 %v99, 16
    %v105 = vmul.u32 %v101, %v103
    %v106 = vmul.u32 %v101, %v104
    %v107 = vmul.u32 %v102, %v103
    %v108 = vmul.u32 %v102, %v104
    %v109 = vshll.u32 %v106, 16
    %v110 = vshrl.u32 %v106, 16
    %v111 = vshll.u32 %v107, 16
    %v112 = vshrl.u32 %v107, 16
    %vm113 = vc.u32 %v105, %v109
    %v114 = vsel %vm113, 1, 0
    %v115 = vadd.s32 %v105, %v109
    %v116 = vadd.s32 %v108, %v114
    %vm117 = vc.u32 %v115, %v111
    %v118 = vsel %vm117, 1, 0
    %v119 = vadd.s32 %v115, %v111
    %v120 = vadd.s32 %v116, %v118
    %v121 = vadd.s32 %v120, %v110
    %v122 = vadd.s32 %v121, %v112
    %v123 = vand.u32 %v100, 65535
    %v124 = vshrl.u32 %v100, 16
    %v125 = vand.u32 %v95, 65535
    %v126 = vshrl.u32 %v95, 16
    %v127 = vmul.u32 %v123, %v125
    %v128 = vmul.u32 %v123, %v126
    %v129 = vmul.u32 %v124, %v125
    %v130 = vmul.u32 %v124, %v126
    %v131 = vshll.u32 %v128, 16
    %v132 = vshrl.u32 %v128, 16
    %v133 = vshll.u32 %v129, 16
    %v134 = vshrl.u32 %v129, 16
    %vm135 = vc.u32 %v127, %v131
    %v136 = vsel %vm135, 1, 0
    %v137 = vadd.s32 %v127, %v131
    %v138 = vadd.s32 %v130, %v136
    %vm139 = vc.u32 %v137, %v133
    %v140 = vsel %vm139, 1, 0
    %v141 = vadd.s32 %v137, %v133
    %v142 = vadd.s32 %v138, %v140
    %v143 = vadd.s32 %v142, %v132
    %v144 = vadd.s32 %v143, %v134
    %v145 = vmul.u32 %v100, %v91
    %v146 = vadd.s32 %v122, %v141
    %vm147 = vc.u32 %v122, %v141
    %v148 = vadd.s32 %v144, 1
    %v149 = vsel %vm147, %v148, %v144
    %v150 = vadd.s32 %v145, %v149
    %v151 = vadd.s32 %v150, 536870912
    %v152 = vshrl.u32 %v151, 30
    %v153 = vshll.u32 %v152, 30
    %v154 = vsub.s32 %v150, %v153
    %vm155 = vcmp.lt.s32.totalorder %v154, 0
    %v156 = vsub.s32 0, %v154
    %v157 = vsel %vm155, %v156, %v154
    %v158 = vclz %v157
    %v159 = vsub.s32 %v158, 2
    %vm160 = vcmp.gt.s32.totalorder 0, %v159
    %v161 = vsel %vm160, 0, %v159
    %v162 = vsub.s32 32, %v161
    %v163 = vshll.u32 %v154, %v161
    %v164 = vshrl.u32 %v146, %v162
    %v165 = vor.u32 %v163, %v164
    %v166 = vsub.s32 4294967266, %v161
    %v167 = vadd.s32 %v166, 127
    %v168 = vshll.u32 %v167, 23
    %v169 = vor.u32 4788187, %v168
    %v170 = vand.u32 2147483647, %v169
    %v172 = vcvt.s32.f32 %v165
    %v173 = vmul.f32 %v172, %v170
    %v174 = vxor.u32 %v173, 2147483648
    %v175 = vsel %vm54, %v174, %v173
    %v176 = vsub.s32 4, %v152
    %v177 = vsel %vm54, %v176, %v152
    %v178 = vsel %vm53, %v50, %v175
    %v179 = vsel %vm53, 0, %v177
    %v180 = vmul.f32 %v178, %v178
    %v181 = vmul.f32 %v180, -0.001358992
    %v182 = vadd.f32 %v181, 0.041655596
    %v183 = vmul.f32 %v180, %v182
    %v184 = vadd.f32 %v183, -0.4999988
    %v185 = vmul.f32 %v180, %v184
    %v186 = vadd.f32 1.0, %v185
    %v187 = vmul.f32 %v178, %v178
    %v188 = vmul.f32 %v187, -0.00019511016
    %v189 = vadd.f32 %v188, 0.008332121
    %v190 = vmul.f32 %v187, %v189
    %v191 = vadd.f32 %v190, -0.16666654
    %v192 = vmul.f32 %v187, %v191
    %v193 = vadd.f32 %v192, 1.0
    %v194 = vmul.f32 %v193, %v178
    %vm195 = vweird.f32 %v50
    %v196 = vand.u32 %v179, 3
    %vm197 = vcmp.lt.s32.totalorder %v196, 2
    %vm198 = vcmp.eq.s32.totalorder %v196, 0
    %v199 = vxor.u32 %v194, 2147483648
    %v200 = vsel %vm198, %v186, %v199
    %vm201 = vcmp.eq.s32.totalorder %v196, 2
    %v202 = vxor.u32 %v186, 2147483648
    %v203 = vsel %vm201, %v202, %v194
    %v204 = vsel %vm197, %v200, %v203
    %v205 = vsel %vm195, nan, %v204
    %v206 = vand.u32 2147483647, %v51
    %vm207 = vcmp.le.f32.partialorder %v206, 0.7853982
    %vm208 = vcmp.lt.s32.totalorder %v51, 0
    %v209 = vand.u32 %v51, 2139095040
    %v210 = vshrl.u32 %v209, 23
    %v211 = vsub.s32 %v210, 127
    %v212 = vand.u32 2147483647, %v51
    %v213 = vand.u32 %v212, 8388607
    %v214 = vor.u32 %v213, 8388608
    %v215 = vsub.s32 0, %v214
    %v216 = vadd.s32 %v211, 1
    %vm217 = vcmp.gt.s32.totalorder %v216, 0
    %v218 = vsel %vm217, %v216, 0
    %v219 = vshrl.u32 %v218, 5
    %v220 = vand.u32 %v218, 31
    %v221 = vsub.s32 32, %v220
    %v222 = vshrl.u32 683565275, %v221
    %v223 = vshll.u32 683565275, %v220
    %v224 = vshrl.u32 2475754826, %v221
    %v225 = vor.u32 %v223, %v224
    %v226 = vshll.u32 2475754826, %v220
    %v227 = vshrl.u32 2131351028, %v221
    %v228 = vor.u32 %v226, %v227
    %v229 = vshll.u32 2131351028, %v220
    %v230 = vshrl.u32 2102212464, %v221
    %v231 = vor.u32 %v229, %v230
    %v232 = vshll.u32 2102212464, %v220
    %v233 = vshrl.u32 920167782, %v221
    %v234 = vor.u32 %v232, %v233
    %v235 = vshll.u32 920167782, %v220
    %v236 = vshrl.u32 1326507024, %v221
    %v237 = vor.u32 %v235, %v236
    %vm238 = vcmp.lt.s32.totalorder %v219, 1
    %vm239 = vcmp.lt.s32.totalorder %v219, 2
    %vm240 = vcmp.lt.s32.totalorder %v219, 3
    %vm241 = vcmp.lt.s32.totalorder %v219, 4
    %v242 = vsel %vm238, %v222, %v225
    %v243 = vsel %vm241, %v231, 2102212464
    %v244 = vsel %vm240, %v228, %v243
    %v245 = vsel %vm239, %v242, %v244
    %v246 = vsel %vm238, %v225, %v228
    %v247 = vsel %vm241, %v234, 920167782
    %v248 = vsel %vm240, %v231, %v247
    %v249 = vsel %vm239, %v246, %v248
    %v250 = vsel %vm238, %v228, %v231
    %v251 = vsel %vm241, %v237, 1326507024
    %v252 = vsel %vm240, %v234, %v251
    %v253 = vsel %vm239, %v250, %v252
    %v254 = vshll.u32 %v214, 8
    %v255 = vand.u32 %v254, 65535
    %v256 = vshrl.u32 %v254, 16
    %v257 = vand.u32 %v253, 65535
    %v258 = vshrl.u32 %v253, 16
    %v259 = vmul.u32 %v255, %v257
    %v260 = vmul.u32 %v255, %v258
    %v261 = vmul.u32 %v256, %v257
    %v262 = vmul.u32 %v256, %v258
    %v263 = vshll.u32 %v260, 16
    %v264 = vshrl.u32 %v260, 16
    %v265 = vshll.u32 %v261, 16
    %v266 = vshrl.u32 %v261, 16
    %vm267 = vc.u32 %v259, %v263
    %v268 = vsel %vm267, 1, 0
    %v269 = vadd.s32 %v259, %v263
    %v270 = vadd.s32 %v262, %v268
    %vm271 = vc.u32 %v269, %v265
    %v272 = vsel %vm271, 1, 0
    %v273 = vadd.s32 %v269, %v265
    %v274 = vadd.s32 %v270, %v272
    %v275 = vadd.s32 %v274, %v264
    %v276 = vadd.s32 %v275, %v266
    %v277 = vand.u32 %v254, 65535
    %v278 = vshrl.u32 %v254, 16
    %v279 = vand.u32 %v249, 65535
    %v280 = vshrl.u32 %v249, 16
    %v281 = vmul.u32 %v277, %v279
    %v282 = vmul.u32 %v277, %v280
    %v283 = vmul.u32 %v278, %v279
    %v284 = vmul.u32 %v278, %v280
    %v285 = vshll.u32 %v282, 16
    %v286 = vshrl.u32 %v282, 16
    %v287 = vshll.u32 %v283, 16
    %v288 = vshrl.u32 %v283, 16
    %vm289 = vc.u32 %v281, %v285
    %v290 = vsel %vm289, 1, 0
    %v291 = vadd.s32 %v281, %v285
    %v292 = vadd.s32 %v284, %v290
    %vm293 = vc.u32 %v291, %v287
    %v294 = vsel %vm293, 1, 0
    %v295 = vadd.s32 %v291, %v287
    %v296 = vadd.s32 %v292, %v294
    %v297 = vadd.s32 %v296, %v286
    %v298 = vadd.s32 %v297, %v288
    %v299 = vmul.u32 %v254, %v245
    %v300 = vadd.s32 %v276, %v295
    %vm301 = vc.u32 %v276, %v295
    %v302 = vadd.s32 %v298, 1
    %v303 = vsel %vm301, %v302, %v298
    %v304 = vadd.s32 %v299, %v303
    %v305 = vadd.s32 %v304, 536870912
    %v306 = vshrl.u32 %v305, 30
    %v307 = vshll.u32 %v306, 30
    %v308 = vsub.s32 %v304, %v307
    %vm309 = vcmp.lt.s32.totalorder %v308, 0
    %v310 = vsub.s32 0, %v308
    %v311 = vsel %vm309, %v310, %v308
    %v312 = vclz %v311
    %v313 = vsub.s32 %v312, 2
    %vm314 = vcmp.gt.s32.totalorder 0, %v313
    %v315 = vsel %vm314, 0, %v313
    %v316 = vsub.s32 32, %v315
    %v317 = vshll.u32 %v308, %v315
    %v318 = vshrl.u32 %v300, %v316
    %v319 = vor.u32 %v317, %v318
    %v320 = vsub.s32 4294967266, %v315
    %v321 = vadd.s32 %v320, 127
    %v322 = vshll.u32 %v321, 23
    %v323 = vor.u32 4788187, %v322
    %v324 = vand.u32 2147483647, %v323
    %v326 = vcvt.s32.f32 %v319
    %v327 = vmul.f32 %v326, %v324
    %v328 = vxor.u32 %v327, 2147483648
    %v329 = vsel %vm208, %v328, %v327
    %v330 = vsub.s32 4, %v306
    %v331 = vsel %vm208, %v330, %v306
    %v332 = vsel %vm207, %v51, %v329
    %v333 = vsel %vm207, 0, %v331
    %v334 = vmul.f32 %v332, %v332
    %v335 = vmul.f32 %v334, -0.001358992
    %v336 = vadd.f32 %v335, 0.041655596
    %v337 = vmul.f32 %v334, %v336
    %v338 = vadd.f32 %v337, -0.4999988
    %v339 = vmul.f32 %v334, %v338
    %v340 = vadd.f32 1.0, %v339
    %v341 = vmul.f32 %v332, %v332
    %v342 = vmul.f32 %v341, -0.00019511016
    %v343 = vadd.f32 %v342, 0.008332121
    %v344 = vmul.f32 %v341, %v343
    %v345 = vadd.f32 %v344, -0.16666654
    %v346 = vmul.f32 %v341, %v345
    %v347 = vadd.f32 %v346, 1.0
    %v348 = vmul.f32 %v347, %v332
    %vm349 = vweird.f32 %v51
    %v350 = vand.u32 %v333, 3
    %vm351 = vcmp.lt.s32.totalorder %v350, 2
    %vm352 = vcmp.eq.s32.totalorder %v350, 0
    %v353 = vxor.u32 %v348, 2147483648
    %v354 = vsel %vm352, %v340, %v353
    %vm355 = vcmp.eq.s32.totalorder %v350, 2
    %v356 = vxor.u32 %v340, 2147483648
    %v357 = vsel %vm355, %v356, %v348
    %v358 = vsel %vm351, %v354, %v357
    %v359 = vsel %vm349, nan, %v358
    %v360 = vmul.f32 %v205, 2.0
    %v361 = vmul.f32 %v359, 2.0
    %v362 = vmul.f32 %v360, %v205
    %v363 = vmul.f32 %v361, %v359
    %v364 = vsub.f32 %v362, 1.0
    %v365 = vsub.f32 %v363, 1.0
    %v366 = vmul.f32 %v205, 0.78529817
    %v367 = vmul.f32 %v359, 0.78529817
    %v368 = vadd.f32 %v366, 0.58897364
    %v369 = vadd.f32 %v367, 0.58897364
    %v370 = vmul.f32 %v364, 0.19632454
    %v371 = vmul.f32 %v365, 0.19632454
    %v372 = vadd.f32 %v368, %v370
    %v373 = vadd.f32 %v369, %v371
    %v374 = vld [vmem:[#allocation5] sm:$0xff]
    %v375 = vld [vmem:[#allocation5 + $0x8] sm:$0xff]
    %v376 = vld [vmem:[#allocation5 + $0x10] sm:$0xff]
    %v377 = vld [vmem:[#allocation5 + $0x18] sm:$0xff]
    %v378 = vld [vmem:[#allocation5 + $0x20] sm:$0xff]
    %v379 = vld [vmem:[#allocation5 + $0x28] sm:$0xff]
    %v380 = vld [vmem:[#allocation5 + $0x30] sm:$0xff]
    %v381 = vld [vmem:[#allocation5 + $0x38] sm:$0xff]
    %vm382 = vcmask 523264
    %v384 = vsel %vm382, %v372, 0
    %v387 = vsel %vm382, %v373, 0
    %389 = vmatpush.msra.mxu0 0.0
    %390 = vmatpush.msra.mxu0 0.0
    %391 = vmatpush.msra.mxu0 0.0
    %392 = vmatpush.msra.mxu0 0.0
    %393 = vmatpush.msra.mxu0 0.0
    %394 = vmatpush.msra.mxu0 0.0
    %395 = vmatpush.msra.mxu0 0.0
    %396 = vmatpush.msra.mxu0 0.0
    %397 = vmatpush.msra.mxu0 %v381
    %398 = vmatpush.msra.mxu0 %v380
    %399 = vmatpush.msra.mxu0 %v379
    %400 = vmatpush.msra.mxu0 %v378
    %401 = vmatpush.msra.mxu0 %v377
    %402 = vmatpush.msra.mxu0 %v376
    %403 = vmatpush.msra.mxu0 %v375
    %404 = vmatpush.msra.mxu0 %v374
    %405 = vmatmul.f32.gmra.mxu0 %v384
    %v406 = vpop.f32.mrf.mxu0
    %v407 = vadd.f32 0.0, %v406
    %408 = vmatmul.f32.gmra.mxu0 %v387
    %v409 = vpop.f32.mrf.mxu0
    %v410 = vadd.f32 0.0, %v409
    %411 = vdwg.mxu0
    %v412 = vsel %vm382, %v407, 0.0
    %413 = vadd.xlane.f32.xlu0 %v412
    %v414 = vpop.xlane.xlu0 %413
    %v415 = vsel %vm382, %v410, 0.0
    %416 = vadd.xlane.f32.xlu0 %v415
    %v417 = vpop.xlane.xlu0 %416
    %v418 = vrcp.pop 64.0
    %v419 = vmul.f32 64.0, %v418
    %v420 = vsub.f32 1.0, %v419
    %v421 = vmul.f32 %v418, %v420
    %v422 = vadd.f32 %v418, %v421
    %vm423 = vweird.f32 %v418
    %v424 = vsel %vm423, %v418, %v422
    %v425 = vmul.f32 %v414, %v424
    %v426 = vmul.f32 %v417, %v424
    %v427 = vsub.f32 %v407, %v425
    %v428 = vsub.f32 %v410, %v426
    %v429 = vmul.f32 %v427, %v427
    %v430 = vmul.f32 %v428, %v428
    %v431 = vsel %vm382, %v429, 0.0
    %432 = vadd.xlane.f32.xlu0 %v431
    %v433 = vpop.xlane.xlu0 %432
    %v434 = vsel %vm382, %v430, 0.0
    %435 = vadd.xlane.f32.xlu0 %v434
    %v436 = vpop.xlane.xlu0 %435
    %v437 = vmul.f32 %v433, %v424
    %v438 = vmul.f32 %v436, %v424
    %v439 = vadd.f32 %v437, 1e-05
    %v440 = vadd.f32 %v438, 1e-05
    %v441 = vrsqrt.pop %v439
    %v442 = vmul.f32 %v441, %v439
    %v443 = vmul.f32 %v442, %v441
    %v444 = vmul.f32 0.5, %v443
    %v445 = vsub.f32 1.5, %v444
    %v446 = vmul.f32 %v441, %v445
    %vm447 = vweird.f32 %v439
    %vm448 = vweird.f32 %v441
    %vm449 = vmor %vm447, %vm448
    %v450 = vsel %vm449, %v441, %v446
    %v451 = vrsqrt.pop %v440
    %v452 = vmul.f32 %v451, %v440
    %v453 = vmul.f32 %v452, %v451
    %v454 = vmul.f32 0.5, %v453
    %v455 = vsub.f32 1.5, %v454
    %v456 = vmul.f32 %v451, %v455
    %vm457 = vweird.f32 %v440
    %vm458 = vweird.f32 %v451
    %vm459 = vmor %vm457, %vm458
    %v460 = vsel %vm459, %v451, %v456
    %v461 = vmul.f32 %v427, %v450
    %v462 = vmul.f32 %v428, %v460
    %v463 = vld [vmem:[%s2] sm:$0x1]
    %v465 = vperm.slane %v463, 0
    %v467 = vmul.f32 %v461, %v465
    %v468 = vmul.f32 %v462, %v465
    %v469 = vld [vmem:[%s3] sm:$0x1]
    %v471 = vperm.slane %v469, 0
    %v473 = vadd.f32 %v467, %v471
    %v474 = vadd.f32 %v468, %v471
    %475 = vst.msk [vmem:[#allocation7] sm:$0xff] %vm382, %v473
    %476 = vst.msk [vmem:[#allocation7 + $0x8] sm:$0xff] %vm382, %v474
    // Predicated region
    $region26: #{tpu_custom_call.1} parent=1 // pred_check
      _
    $region27: #{tpu_custom_call.1} parent=1 // pred_check_branch
      %478 = sbr.rel (0) target = $region29
    $region28: #{tpu_custom_call.1} parent=1 // pred_region
      %480 = vsyncadd [#allocation4], 0
      %s481 = sshll.u32 [#allocation7], 4
      %s482 = int_to_ptr.vmem [resolvable:$true] %s481
      %s483 = sshll.u32 %s4, 4
      %s484 = int_to_ptr.hbm [resolvable:$true] %s483
      %489 = dma.vmem_to_hbm [thread:$0]  %s482, 256, %s484, [#allocation4], 128, 128, 8
    $region29: #{tpu_custom_call.1} parent=1 // pred_fallthru
      _
    // Predicated region
    $region30: #{tpu_custom_call.1} parent=1 // pred_check
      _
    $region31: #{tpu_custom_call.1} parent=1 // pred_check_branch
      %491 = sbr.rel (0) target = $region33
    $region32: #{tpu_custom_call.1} parent=1 // pred_region
      %493 = dma.done [#allocation4], 256
    $region33: #{tpu_custom_call.1} parent=1 // pred_fallthru
      _
    %494 = vsyncpa [#allocation3], 1
    %495 = vsyncpa [#allocation6], 1
    %496 = vsyncpa [#allocation4], 1

</llo_original>
